<compile_context>
chip_gen: v7x
topology: tpu7x:2x2x1
jax: 0.10.0
libtpu: 0.0.40
codegen_flags: <defaults>
</compile_context>

<pallas_src>
import jax
import jax.numpy as jnp
import numpy as np
from jax.experimental import pallas as pl
from jax.experimental.pallas import tpu as pltpu


# ---------------------------------------------------------------------------
# Small-problem path: one fused kernel, everything resident in VMEM.
# ---------------------------------------------------------------------------
def _gnn_fused_kernel(x_ref, adj_ref, w1_ref, b1_ref, w2_ref, b2_ref, o_ref):
    x = x_ref[...]          # [N, F_in]
    adj = adj_ref[...]      # [N, N]  normalized adjacency

    # GCNConv 1: A_hat @ (X @ W1) + b1
    xw1 = jnp.dot(x, w1_ref[...], preferred_element_type=jnp.float32)
    h1 = jnp.dot(adj, xw1, preferred_element_type=jnp.float32) + b1_ref[...]
    h1 = jnp.maximum(h1, 0.0)                       # ReLU
    # Dropout: identity (eval mode)

    # GCNConv 2: A_hat @ (H1 @ W2) + b2
    hw2 = jnp.dot(h1, w2_ref[...], preferred_element_type=jnp.float32)
    h2 = jnp.dot(adj, hw2, preferred_element_type=jnp.float32) + b2_ref[...]

    # log_softmax over dim=1 (feature axis)
    m = jnp.max(h2, axis=1, keepdims=True)
    z = h2 - m
    lse = jnp.log(jnp.sum(jnp.exp(z), axis=1, keepdims=True))
    o_ref[...] = z - lse


def _gnn_fused(x, adj, w1, b1, w2, b2):
    n, _ = x.shape
    f_out = w2.shape[1]
    full = lambda shape: pl.BlockSpec(shape, lambda: tuple(0 for _ in shape))
    return pl.pallas_call(
        _gnn_fused_kernel,
        out_shape=jax.ShapeDtypeStruct((n, f_out), jnp.float32),
        grid=(),
        in_specs=[full(x.shape), full(adj.shape), full(w1.shape),
                  full(b1.shape), full(w2.shape), full(b2.shape)],
        out_specs=full((n, f_out)),
        compiler_params=pltpu.CompilerParams(vmem_limit_bytes=32 << 20),
    )(x, adj, w1, b1, w2, b2)


# ---------------------------------------------------------------------------
# Tiled feature-major path.
# ---------------------------------------------------------------------------
def _feat_kernel(wt_ref, xt_ref, zt_ref):
    # Z1^T tile = W1^T @ X^T tile   -> [hidden, tc]
    zt_ref[...] = jnp.dot(wt_ref[...], xt_ref[...],
                          preferred_element_type=jnp.float32
                          ).astype(zt_ref.dtype)


def _feat_matmul(wt, xt, *, tc, out_dtype):
    """Z^T = W^T @ X^T, computed once (hoisted out of the adjacency loop)."""
    f_out, f_in = wt.shape
    _, n_pad = xt.shape
    return pl.pallas_call(
        _feat_kernel,
        out_shape=jax.ShapeDtypeStruct((f_out, n_pad), out_dtype),
        grid=(n_pad // tc,),
        in_specs=[
            pl.BlockSpec((f_out, f_in), lambda i: (0, 0)),
            pl.BlockSpec((f_in, tc), lambda i: (0, i)),
        ],
        out_specs=pl.BlockSpec((f_out, tc), lambda i: (0, i)),
        compiler_params=pltpu.CompilerParams(
            dimension_semantics=("parallel",),
            vmem_limit_bytes=32 << 20),
    )(wt, xt)


def _layer1_kernel(z1t_ref, a_ref, b1_ref, w2t_ref, o_ref, acc_ref):
    """Z2^T tile = W2^T @ relu(Z1^T @ A_hat + b1) for one column tile."""
    k = pl.program_id(1)

    @pl.when(k == 0)
    def _():
        acc_ref[...] = jnp.zeros_like(acc_ref)

    # [hidden, tk] @ [tk, tn] -> [hidden, tn]   (lanes = node columns)
    acc_ref[...] += jnp.dot(z1t_ref[...], a_ref[...],
                            preferred_element_type=jnp.float32)

    @pl.when(k == pl.num_programs(1) - 1)
    def _():
        h1 = jnp.maximum(acc_ref[...] + b1_ref[...], 0.0)   # bias + ReLU
        # Dropout: identity (eval mode)
        # Fused layer-2 feature projection: [F_in, hidden] @ [hidden, tn]
        o_ref[...] = jnp.dot(w2t_ref[...], h1.astype(w2t_ref.dtype),
                             preferred_element_type=jnp.float32
                             ).astype(o_ref.dtype)


def _layer1_matmul(z1t, a, b1c, w2t, *, tn, tk, out_dtype):
    hidden, n_pad = z1t.shape
    f_in = w2t.shape[0]
    return pl.pallas_call(
        _layer1_kernel,
        out_shape=jax.ShapeDtypeStruct((f_in, n_pad), out_dtype),
        grid=(n_pad // tn, n_pad // tk),          # reduction axis last
        in_specs=[
            pl.BlockSpec((hidden, tk), lambda i, k: (0, k)),
            pl.BlockSpec((tk, tn), lambda i, k: (k, i)),
            pl.BlockSpec((hidden, 1), lambda i, k: (0, 0)),
            pl.BlockSpec((f_in, hidden), lambda i, k: (0, 0)),
        ],
        out_specs=pl.BlockSpec((f_in, tn), lambda i, k: (0, i)),
        scratch_shapes=[pltpu.VMEM((hidden, tn), jnp.float32)],
        compiler_params=pltpu.CompilerParams(
            dimension_semantics=("parallel", "arbitrary"),
            vmem_limit_bytes=32 << 20),
    )(z1t, a, b1c, w2t)


def _layer2_kernel(z2t_ref, a_ref, b2_ref, o_ref, acc_ref):
    """H2^T tile = log_softmax_feat(Z2^T @ A_hat + b2) for one column tile."""
    k = pl.program_id(1)

    @pl.when(k == 0)
    def _():
        acc_ref[...] = jnp.zeros_like(acc_ref)

    acc_ref[...] += jnp.dot(z2t_ref[...], a_ref[...],
                            preferred_element_type=jnp.float32)

    @pl.when(k == pl.num_programs(1) - 1)
    def _():
        h = acc_ref[...] + b2_ref[...]
        # log_softmax over the feature axis == axis 0 in transposed layout
        m = jnp.max(h, axis=0, keepdims=True)
        z = h - m
        o_ref[...] = (z - jnp.log(jnp.sum(jnp.exp(z), axis=0, keepdims=True))
                      ).astype(o_ref.dtype)


def _layer2_matmul(z2t, a, b2c, *, tn, tk):
    f_in, n_pad = z2t.shape
    return pl.pallas_call(
        _layer2_kernel,
        out_shape=jax.ShapeDtypeStruct((f_in, n_pad), jnp.float32),
        grid=(n_pad // tn, n_pad // tk),          # reduction axis last
        in_specs=[
            pl.BlockSpec((f_in, tk), lambda i, k: (0, k)),
            pl.BlockSpec((tk, tn), lambda i, k: (k, i)),
            pl.BlockSpec((f_in, 1), lambda i, k: (0, 0)),
        ],
        out_specs=pl.BlockSpec((f_in, tn), lambda i, k: (0, i)),
        scratch_shapes=[pltpu.VMEM((f_in, tn), jnp.float32)],
        compiler_params=pltpu.CompilerParams(
            dimension_semantics=("parallel", "arbitrary"),
            vmem_limit_bytes=32 << 20),
    )(z2t, a, b2c)


def _gnn_tiled(x, adj, w1, b1, w2, b2, *, tn, tk, compute_dtype):
    n, f_in = x.shape
    if max(tn, tk) % min(tn, tk) != 0:
        raise ValueError("tn and tk must divide each other")
    t = max(tn, tk)
    n_pad = pl.cdiv(n, t) * t

    # Pad to tile multiples; zero-padded adjacency rows/cols keep padded
    # contributions exactly zero, padded output columns are sliced off.
    xt = jnp.zeros((f_in, n_pad), compute_dtype).at[:, :n].set(
        x.T.astype(compute_dtype))
    a = jnp.zeros((n_pad, n_pad), compute_dtype).at[:n, :n].set(
        adj.astype(compute_dtype))

    w1t = w1.T.astype(compute_dtype)              # [hidden, F_in]
    w2t = w2.T.astype(compute_dtype)              # [F_in, hidden]
    b1c = b1.reshape(-1, 1).astype(jnp.float32)   # [hidden, 1]
    b2c = b2.reshape(-1, 1).astype(jnp.float32)   # [F_in, 1]

    # Layer 1 feature matmul (hoisted out of the adjacency stream).
    z1t = _feat_matmul(w1t, xt, tc=tk, out_dtype=compute_dtype)
    # Layer 1 adjacency stream + bias + ReLU + fused layer-2 projection.
    z2t = _layer1_matmul(z1t, a, b1c, w2t, tn=tn, tk=tk,
                         out_dtype=compute_dtype)
    # Layer 2 adjacency stream + bias + log_softmax.
    h2t = _layer2_matmul(z2t, a, b2c, tn=tn, tk=tk)

    # Back to node-major [N, F] (layout plumbing outside the kernel).
    return h2t[:, :n].T


# ---------------------------------------------------------------------------
# Dispatcher.
# ---------------------------------------------------------------------------
def gnn_forward(x, adj, w1, b1, w2, b2, *, force_tiled=False,
                tn=512, tk=512, compute_dtype=jnp.bfloat16,
                small_threshold=512):
    n = x.shape[0]
    if n <= small_threshold and not force_tiled:
        return _gnn_fused(x, adj, w1, b1, w2, b2)
    return _gnn_tiled(x, adj, w1, b1, w2, b2, tn=tn, tk=tk,
                      compute_dtype=compute_dtype)


def normalized_adjacency(edge_index, num_nodes):
    """Dense A_hat = D^-1/2 (A + I) D^-1/2 (GCNConv default normalization)."""
    row, col = edge_index
    a = jnp.zeros((num_nodes, num_nodes), jnp.float32)
    a = a.at[row, col].set(1.0)
    a = a + jnp.eye(num_nodes, dtype=jnp.float32)          # self-loops
    deg = jnp.sum(a, axis=1)
    dinv = jnp.where(deg > 0, 1.0 / jnp.sqrt(deg), 0.0)
    return dinv[:, None] * a * dinv[None, :]


if __name__ == "__main__":
    # Shapes implied by the module: station_num=184 graph nodes, enc_in
    # features per node, hidden_model=16 in the first GCNConv.
    station_num = 184
    enc_in = 32
    hidden = 16

    key = jax.random.PRNGKey(0)
    kx, kw1, kw2 = jax.random.split(key, 3)

    x = jax.random.normal(kx, (station_num, enc_in), dtype=jnp.float32)

    # Deterministic bidirectional ring graph edge_index [2, 2N].
    src = np.arange(station_num)
    dst = (src + 1) % station_num
    edge_index = jnp.asarray(
        np.stack([np.concatenate([src, dst]), np.concatenate([dst, src])]),
        dtype=jnp.int32)
    adj = normalized_adjacency(edge_index, station_num)

    # Glorot-style deterministic init (GCNConv: glorot weight, zero bias).
    def glorot(k, shape):
        limit = float(np.sqrt(6.0 / (shape[0] + shape[1])))
        return jax.random.uniform(k, shape, jnp.float32, -limit, limit)

    w1 = glorot(kw1, (enc_in, hidden))
    b1 = jnp.zeros((1, hidden), jnp.float32)
    w2 = glorot(kw2, (hidden, enc_in))
    b2 = jnp.zeros((1, enc_in), jnp.float32)

    # Plain-JAX reference.
    h1 = jnp.maximum(adj @ (x @ w1) + b1, 0.0)
    h2 = adj @ (h1 @ w2) + b2
    ref = jax.nn.log_softmax(h2, axis=1)

    # 1) small-problem single-shot path (f32, dispatched automatically)
    out_small = gnn_forward(x, adj, w1, b1, w2, b2)
    jax.block_until_ready(out_small)
    assert jnp.allclose(out_small, ref, atol=1e-5, rtol=1e-5)

    # 2) tiled feature-major path, f32 compute (exercises the pipeline,
    #    accumulator init/finalize, fused layer-2 projection and padding
    #    with a (2, 2) grid)
    out_tiled_f32 = gnn_forward(x, adj, w1, b1, w2, b2, force_tiled=True,
                                tn=128, tk=128, compute_dtype=jnp.float32)
    jax.block_until_ready(out_tiled_f32)
    assert jnp.allclose(out_tiled_f32, ref, atol=1e-3, rtol=1e-3)

    # 3) tiled path with the production bf16 setting (looser tolerance)
    out_tiled_bf16 = gnn_forward(x, adj, w1, b1, w2, b2, force_tiled=True,
                                 tn=128, tk=128, compute_dtype=jnp.bfloat16)
    jax.block_until_ready(out_tiled_bf16)
    assert jnp.allclose(out_tiled_bf16, ref, atol=5e-2, rtol=5e-2)

    print("KERNEL_OK")
</pallas_src>

<mosaic_0001>
module attributes {stable_mosaic.version = 11 : i64} {
  func.func @_gnn_fused_kernel(%arg0: memref<184x32xf32, #tpu.memory_space<vmem>>, %arg1: memref<184x184xf32, #tpu.memory_space<vmem>>, %arg2: memref<32x16xf32, #tpu.memory_space<vmem>>, %arg3: memref<1x16xf32, #tpu.memory_space<vmem>>, %arg4: memref<16x32xf32, #tpu.memory_space<vmem>>, %arg5: memref<1x32xf32, #tpu.memory_space<vmem>>, %arg6: memref<184x32xf32, #tpu.memory_space<vmem>>) attributes {dimension_semantics = [], scalar_prefetch = 0 : i64, scratch_operands = 0 : i64, tpu.core_type = #tpu.core_type<tc>} {
    %c0 = arith.constant 0 : index
    %c0_0 = arith.constant 0 : index
    %0 = vector.load %arg0[%c0, %c0_0] : memref<184x32xf32, #tpu.memory_space<vmem>>, vector<184x32xf32>
    %c0_1 = arith.constant 0 : index
    %c0_2 = arith.constant 0 : index
    %1 = vector.load %arg1[%c0_1, %c0_2] : memref<184x184xf32, #tpu.memory_space<vmem>>, vector<184x184xf32>
    %c0_3 = arith.constant 0 : index
    %c0_4 = arith.constant 0 : index
    %2 = vector.load %arg2[%c0_3, %c0_4] : memref<32x16xf32, #tpu.memory_space<vmem>>, vector<32x16xf32>
    %cst = arith.constant dense<0.000000e+00> : vector<184x16xf32>
    %3 = tpu.matmul %0, %2, %cst {dimension_numbers = #tpu.dot_dimension_numbers<[1], [0], [0], [1], [0, 0, 1, 1], [], []>} : vector<184x32xf32>, vector<32x16xf32>, vector<184x16xf32> -> vector<184x16xf32>
    %cst_5 = arith.constant dense<0.000000e+00> : vector<184x16xf32>
    %4 = tpu.matmul %1, %3, %cst_5 {dimension_numbers = #tpu.dot_dimension_numbers<[1], [0], [0], [1], [0, 0, 1, 1], [], []>} : vector<184x184xf32>, vector<184x16xf32>, vector<184x16xf32> -> vector<184x16xf32>
    %c0_6 = arith.constant 0 : index
    %c0_7 = arith.constant 0 : index
    %5 = vector.load %arg3[%c0_6, %c0_7] : memref<1x16xf32, #tpu.memory_space<vmem>>, vector<1x16xf32>
    %6 = vector.broadcast %5 : vector<1x16xf32> to vector<184x16xf32>
    %7 = arith.addf %4, %6 : vector<184x16xf32>
    %cst_8 = arith.constant 0.000000e+00 : f32
    %8 = vector.broadcast %cst_8 : f32 to vector<184x16xf32>
    %9 = arith.maximumf %7, %8 : vector<184x16xf32>
    %c0_9 = arith.constant 0 : index
    %c0_10 = arith.constant 0 : index
    %10 = vector.load %arg4[%c0_9, %c0_10] : memref<16x32xf32, #tpu.memory_space<vmem>>, vector<16x32xf32>
    %cst_11 = arith.constant dense<0.000000e+00> : vector<184x32xf32>
    %11 = tpu.matmul %9, %10, %cst_11 {dimension_numbers = #tpu.dot_dimension_numbers<[1], [0], [0], [1], [0, 0, 1, 1], [], []>} : vector<184x16xf32>, vector<16x32xf32>, vector<184x32xf32> -> vector<184x32xf32>
    %cst_12 = arith.constant dense<0.000000e+00> : vector<184x32xf32>
    %12 = tpu.matmul %1, %11, %cst_12 {dimension_numbers = #tpu.dot_dimension_numbers<[1], [0], [0], [1], [0, 0, 1, 1], [], []>} : vector<184x184xf32>, vector<184x32xf32>, vector<184x32xf32> -> vector<184x32xf32>
    %c0_13 = arith.constant 0 : index
    %c0_14 = arith.constant 0 : index
    %13 = vector.load %arg5[%c0_13, %c0_14] : memref<1x32xf32, #tpu.memory_space<vmem>>, vector<1x32xf32>
    %14 = vector.broadcast %13 : vector<1x32xf32> to vector<184x32xf32>
    %15 = arith.addf %12, %14 : vector<184x32xf32>
    %cst_15 = arith.constant dense<0xFF800000> : vector<184xf32>
    %16 = vector.multi_reduction <maximumf>, %15, %cst_15 [1] : vector<184x32xf32> to vector<184xf32>
    %17 = vector.shape_cast %16 : vector<184xf32> to vector<184x1xf32>
    %18 = vector.broadcast %17 : vector<184x1xf32> to vector<184x32xf32>
    %19 = arith.subf %15, %18 : vector<184x32xf32>
    %20 = math.exp %19 : vector<184x32xf32>
    %cst_16 = arith.constant dense<0.000000e+00> : vector<184xf32>
    %21 = vector.multi_reduction <add>, %20, %cst_16 [1] : vector<184x32xf32> to vector<184xf32>
    %22 = vector.shape_cast %21 : vector<184xf32> to vector<184x1xf32>
    %23 = math.log %22 : vector<184x1xf32>
    %24 = vector.broadcast %23 : vector<184x1xf32> to vector<184x32xf32>
    %25 = arith.subf %19, %24 : vector<184x32xf32>
    %c0_17 = arith.constant 0 : index
    %c0_18 = arith.constant 0 : index
    %26 = vector.load %arg6[%c0_17, %c0_18] : memref<184x32xf32, #tpu.memory_space<vmem>>, vector<184x32xf32>
    tpu.vector_store %arg6[%c0_17, %c0_18], %25 {strides = array<i32>} : memref<184x32xf32, #tpu.memory_space<vmem>>, vector<184x32xf32>,
    return
  }
}

</mosaic_0001>

<llo_original>
// kernel: tpu_custom_call.1
$region0: #{tpu_custom_call.1}
  #allocation0 [shape = 'u32[]', space=smem, size = 0x4, offset = 0x4, fixed_abs, tag = 'smem constant byte address 0x4 - core index']
  #allocation1 [shape = 'u32[144,128]{1,0:T(1,128)}', space=vmem, size = 0x12000, scoped, tag = 'internal scratch']
  %s0 = inlined_call_operand.vmem [shape: f32[184,32], index: 0, kind: input, shape index: {}]
  %s1 = inlined_call_operand.hbm [shape: f32[184,184], index: 1, kind: input, shape index: {}]
  %s2 = inlined_call_operand.vmem [shape: f32[32,16], index: 2, kind: input, shape index: {}]
  %s3 = inlined_call_operand.vmem [shape: f32[1,16], index: 3, kind: input, shape index: {}]
  %s4 = inlined_call_operand.vmem [shape: f32[16,32], index: 4, kind: input, shape index: {}]
  %s5 = inlined_call_operand.vmem [shape: f32[1,32], index: 5, kind: input, shape index: {}]
  %s6 = inlined_call_operand.vmem [shape: f32[184,32], index: 6, kind: output, shape index: {}]
  %s7 = sld [smem:[#allocation0]]
  $region38: #{tpu_custom_call.1} parent=0
    _
  %s9 = ssub.s32 1, %s7
  %s10 = scalar_select 0, %s9, %s7
  $region1: #{tpu_custom_call.1} parent=0
    #allocation2 [shape = 'u8[188416]{0}', space=vmem, size = 0x2e000, scoped, tag = 'input window, operand 1, single buffered']
    #allocation3 [shape = 's32[1]{0}', space=sflag, size = 0x4, scoped, tag = 'scoped memory for tpu_custom_call.1']
    %11 = vsyncpa [#allocation3], 0
    // Predicated region
    $region2: #{tpu_custom_call.1} parent=1 // pred_check
      _
    $region3: #{tpu_custom_call.1} parent=1 // pred_check_branch
      %13 = sbr.rel (0) target = $region5
    $region4: #{tpu_custom_call.1} parent=1 // pred_region
      _
    $region5: #{tpu_custom_call.1} parent=1 // pred_fallthru
      _
    // Predicated region
    $region6: #{tpu_custom_call.1} parent=1 // pred_check
      _
    $region7: #{tpu_custom_call.1} parent=1 // pred_check_branch
      %15 = sbr.rel (0) target = $region9
    $region8: #{tpu_custom_call.1} parent=1 // pred_region
      %s17 = ssub.s32 5888, 5888
      %18 = vsyncadd [#allocation3], %s17
      %s19 = sshll.u32 [#allocation2], 4
      %s20 = int_to_ptr.vmem [resolvable:$true] %s19
      %25 = dma.hbm_to_vmem [thread:$0]  %s1, 5888, %s20, [#allocation3], 256, 256, 16
    $region9: #{tpu_custom_call.1} parent=1 // pred_fallthru
      _
    // Predicated region
    $region10: #{tpu_custom_call.1} parent=1 // pred_check
      _
    $region11: #{tpu_custom_call.1} parent=1 // pred_check_branch
      %27 = sbr.rel (0) target = $region13
    $region12: #{tpu_custom_call.1} parent=1 // pred_region
      _
    $region13: #{tpu_custom_call.1} parent=1 // pred_fallthru
      _
    // Predicated region
    $region14: #{tpu_custom_call.1} parent=1 // pred_check
      _
    $region15: #{tpu_custom_call.1} parent=1 // pred_check_branch
      %29 = sbr.rel (0) target = $region17
    $region16: #{tpu_custom_call.1} parent=1 // pred_region
      _
    $region17: #{tpu_custom_call.1} parent=1 // pred_fallthru
      _
    // Predicated region
    $region18: #{tpu_custom_call.1} parent=1 // pred_check
      _
    $region19: #{tpu_custom_call.1} parent=1 // pred_check_branch
      %31 = sbr.rel (0) target = $region21
    $region20: #{tpu_custom_call.1} parent=1 // pred_region
      _
    $region21: #{tpu_custom_call.1} parent=1 // pred_fallthru
      _
    // Predicated region
    $region22: #{tpu_custom_call.1} parent=1 // pred_check
      _
    $region23: #{tpu_custom_call.1} parent=1 // pred_check_branch
      %33 = sbr.rel (0) target = $region25
    $region24: #{tpu_custom_call.1} parent=1 // pred_region
      _
    $region25: #{tpu_custom_call.1} parent=1 // pred_fallthru
      _
    // Predicated region
    $region26: #{tpu_custom_call.1} parent=1 // pred_check
      _
    $region27: #{tpu_custom_call.1} parent=1 // pred_check_branch
      %35 = sbr.rel (0) target = $region29
    $region28: #{tpu_custom_call.1} parent=1 // pred_region
      %36 = dma.done [#allocation3], 5888
    $region29: #{tpu_custom_call.1} parent=1 // pred_fallthru
      _
    %v37 = vld [vmem:[%s0] sm:$0xff]
    %v38 = vld [vmem:[%s0 + $0x8] sm:$0xff]
    %v39 = vld [vmem:[%s0 + $0x10] sm:$0xff]
    %v40 = vld [vmem:[%s0 + $0x18] sm:$0xff]
    %v41 = vld [vmem:[%s0 + $0x20] sm:$0xff]
    %v42 = vld [vmem:[%s0 + $0x28] sm:$0xff]
    %v43 = vld [vmem:[%s0 + $0x30] sm:$0xff]
    %v44 = vld [vmem:[%s0 + $0x38] sm:$0xff]
    %v45 = vld [vmem:[%s0 + $0x40] sm:$0xff]
    %v46 = vld [vmem:[%s0 + $0x48] sm:$0xff]
    %v47 = vld [vmem:[%s0 + $0x50] sm:$0xff]
    %v48 = vld [vmem:[%s0 + $0x58] sm:$0xff]
    %v49 = vld [vmem:[%s0 + $0x60] sm:$0xff]
    %v50 = vld [vmem:[%s0 + $0x68] sm:$0xff]
    %v51 = vld [vmem:[%s0 + $0x70] sm:$0xff]
    %v52 = vld [vmem:[%s0 + $0x78] sm:$0xff]
    %v53 = vld [vmem:[%s0 + $0x80] sm:$0xff]
    %v54 = vld [vmem:[%s0 + $0x88] sm:$0xff]
    %v55 = vld [vmem:[%s0 + $0x90] sm:$0xff]
    %v56 = vld [vmem:[%s0 + $0x98] sm:$0xff]
    %v57 = vld [vmem:[%s0 + $0xa0] sm:$0xff]
    %v58 = vld [vmem:[%s0 + $0xa8] sm:$0xff]
    %v59 = vld [vmem:[%s0 + $0xb0] sm:$0xff]
    %v60 = vld [vmem:[#allocation2] sm:$0xff]
    %v61 = vld [vmem:[#allocation2 + $0x8] sm:$0xff]
    %v62 = vld [vmem:[#allocation2 + $0x10] sm:$0xff]
    %v63 = vld [vmem:[#allocation2 + $0x18] sm:$0xff]
    %v64 = vld [vmem:[#allocation2 + $0x20] sm:$0xff]
    %v65 = vld [vmem:[#allocation2 + $0x28] sm:$0xff]
    %v66 = vld [vmem:[#allocation2 + $0x30] sm:$0xff]
    %v67 = vld [vmem:[#allocation2 + $0x38] sm:$0xff]
    %v68 = vld [vmem:[#allocation2 + $0x40] sm:$0xff]
    %v69 = vld [vmem:[#allocation2 + $0x48] sm:$0xff]
    %v70 = vld [vmem:[#allocation2 + $0x50] sm:$0xff]
    %v71 = vld [vmem:[#allocation2 + $0x58] sm:$0xff]
    %v72 = vld [vmem:[#allocation2 + $0x60] sm:$0xff]
    %v73 = vld [vmem:[#allocation2 + $0x68] sm:$0xff]
    %v74 = vld [vmem:[#allocation2 + $0x70] sm:$0xff]
    %v75 = vld [vmem:[#allocation2 + $0x78] sm:$0xff]
    %v76 = vld [vmem:[#allocation2 + $0x80] sm:$0xff]
    %v77 = vld [vmem:[#allocation2 + $0x88] sm:$0xff]
    %v78 = vld [vmem:[#allocation2 + $0x90] sm:$0xff]
    %v79 = vld [vmem:[#allocation2 + $0x98] sm:$0xff]
    %v80 = vld [vmem:[#allocation2 + $0xa0] sm:$0xff]
    %v81 = vld [vmem:[#allocation2 + $0xa8] sm:$0xff]
    %v82 = vld [vmem:[#allocation2 + $0xb0] sm:$0xff]
    %v83 = vld [vmem:[#allocation2 + $0xb8] sm:$0xff]
    %v84 = vld [vmem:[#allocation2 + $0xc0] sm:$0xff]
    %v85 = vld [vmem:[#allocation2 + $0xc8] sm:$0xff]
    %v86 = vld [vmem:[#allocation2 + $0xd0] sm:$0xff]
    %v87 = vld [vmem:[#allocation2 + $0xd8] sm:$0xff]
    %v88 = vld [vmem:[#allocation2 + $0xe0] sm:$0xff]
    %v89 = vld [vmem:[#allocation2 + $0xe8] sm:$0xff]
    %v90 = vld [vmem:[#allocation2 + $0xf0] sm:$0xff]
    %v91 = vld [vmem:[#allocation2 + $0xf8] sm:$0xff]
    %v92 = vld [vmem:[#allocation2 + $0x100] sm:$0xff]
    %v93 = vld [vmem:[#allocation2 + $0x108] sm:$0xff]
    %v94 = vld [vmem:[#allocation2 + $0x110] sm:$0xff]
    %v95 = vld [vmem:[#allocation2 + $0x118] sm:$0xff]
    %v96 = vld [vmem:[#allocation2 + $0x120] sm:$0xff]
    %v97 = vld [vmem:[#allocation2 + $0x128] sm:$0xff]
    %v98 = vld [vmem:[#allocation2 + $0x130] sm:$0xff]
    %v99 = vld [vmem:[#allocation2 + $0x138] sm:$0xff]
    %v100 = vld [vmem:[#allocation2 + $0x140] sm:$0xff]
    %v101 = vld [vmem:[#allocation2 + $0x148] sm:$0xff]
    %v102 = vld [vmem:[#allocation2 + $0x150] sm:$0xff]
    %v103 = vld [vmem:[#allocation2 + $0x158] sm:$0xff]
    %v104 = vld [vmem:[#allocation2 + $0x160] sm:$0xff]
    %v105 = vld [vmem:[#allocation2 + $0x168] sm:$0xff]
    %v106 = vld [vmem:[%s2] sm:$0xff]
    %v107 = vld [vmem:[%s2 + $0x8] sm:$0xff]
    %v108 = vld [vmem:[%s2 + $0x10] sm:$0xff]
    %v109 = vld [vmem:[%s2 + $0x18] sm:$0xff]
    %vm110 = vcmask 261120
    %v112 = vsel %vm110, %v37, 0
    %v115 = vsel %vm110, %v38, 0
    %v118 = vsel %vm110, %v39, 0
    %v121 = vsel %vm110, %v40, 0
    %v124 = vsel %vm110, %v41, 0
    %v127 = vsel %vm110, %v42, 0
    %v130 = vsel %vm110, %v43, 0
    %v133 = vsel %vm110, %v44, 0
    %v136 = vsel %vm110, %v45, 0
    %v139 = vsel %vm110, %v46, 0
    %v142 = vsel %vm110, %v47, 0
    %v145 = vsel %vm110, %v48, 0
    %v148 = vsel %vm110, %v49, 0
    %v151 = vsel %vm110, %v50, 0
    %v154 = vsel %vm110, %v51, 0
    %v157 = vsel %vm110, %v52, 0
    %v160 = vsel %vm110, %v53, 0
    %v163 = vsel %vm110, %v54, 0
    %v166 = vsel %vm110, %v55, 0
    %v169 = vsel %vm110, %v56, 0
    %v172 = vsel %vm110, %v57, 0
    %v175 = vsel %vm110, %v58, 0
    %v178 = vsel %vm110, %v59, 0
    %180 = vmatprep.subr.mxu0 0.0
    %181 = vmatpush1.msra.mxu0 %v106
    %182 = vmatprep.subr.mxu0 0.0
    %183 = vmatpush1.msra.mxu0 %v107
    %184 = vmatprep.subr.mxu0 0.0
    %185 = vmatpush1.msra.mxu0 %v108
    %186 = vmatprep.subr.mxu0 0.0
    %187 = vmatpush1.msra.mxu0 %v109
    %188 = vmatprep.subr.mxu0 0.0
    %189 = vmatpush1.msra.mxu0 0.0
    %190 = vmatprep.subr.mxu0 0.0
    %191 = vmatpush1.msra.mxu0 0.0
    %192 = vmatprep.subr.mxu0 0.0
    %193 = vmatpush1.msra.mxu0 0.0
    %194 = vmatprep.subr.mxu0 0.0
    %195 = vmatpush1.msra.mxu0 0.0
    %196 = vmatprep.subr.mxu0 0.0
    %197 = vmatpush1.msra.mxu0 0.0
    %198 = vmatprep.subr.mxu0 0.0
    %199 = vmatpush1.msra.mxu0 0.0
    %200 = vmatprep.subr.mxu0 0.0
    %201 = vmatpush1.msra.mxu0 0.0
    %202 = vmatprep.subr.mxu0 0.0
    %203 = vmatpush1.msra.mxu0 0.0
    %204 = vmatprep.subr.mxu0 0.0
    %205 = vmatpush1.msra.mxu0 0.0
    %206 = vmatprep.subr.mxu0 0.0
    %207 = vmatpush1.msra.mxu0 0.0
    %208 = vmatprep.subr.mxu0 0.0
    %209 = vmatpush1.msra.mxu0 0.0
    %210 = vmatprep.subr.mxu0 0.0
    %211 = vmatpush1.msra.mxu0 0.0
    %212 = vmatprep.subr.mxu0 0.0
    %213 = vmatpush1.msra.mxu0 0.0
    %214 = vmatprep.subr.mxu0 0.0
    %215 = vmatpush1.msra.mxu0 0.0
    %216 = vmatprep.subr.mxu0 0.0
    %217 = vmatpush1.msra.mxu0 0.0
    %218 = vmatprep.subr.mxu0 0.0
    %219 = vmatpush1.msra.mxu0 0.0
    %220 = vmatprep.subr.mxu0 0.0
    %221 = vmatpush1.msra.mxu0 0.0
    %222 = vmatprep.subr.mxu0 0.0
    %223 = vmatpush1.msra.mxu0 0.0
    %224 = vmatprep.subr.mxu0 0.0
    %225 = vmatpush1.msra.mxu0 0.0
    %226 = vmatprep.subr.mxu0 0.0
    %227 = vmatpush1.msra.mxu0 0.0
    %228 = vmatprep.subr.mxu0 0.0
    %229 = vmatpush1.msra.mxu0 0.0
    %230 = vmatprep.subr.mxu0 0.0
    %231 = vmatpush1.msra.mxu0 0.0
    %232 = vmatprep.subr.mxu0 0.0
    %233 = vmatpush1.msra.mxu0 0.0
    %234 = vmatprep.subr.mxu0 0.0
    %235 = vmatpush1.msra.mxu0 0.0
    %236 = vmatprep.subr.mxu0 0.0
    %237 = vmatpush1.msra.mxu0 0.0
    %238 = vmatprep.subr.mxu0 0.0
    %239 = vmatpush1.msra.mxu0 0.0
    %240 = vmatprep.subr.mxu0 0.0
    %241 = vmatpush1.msra.mxu0 0.0
    %242 = vmatprep.subr.mxu0 0.0
    %243 = vmatpush1.msra.mxu0 0.0
    %244 = vmatprep.mubr.f32.mxu0 0.0
    %245 = vmatmul.mubr.f32.gmra.mrb[0].mxu0 %v112
    %v246 = vpop.f32.mrb[0].mxu0
    %v247 = vadd.f32 0.0, %v246
    %v248 = vpop.f32.mrb[0].mxu0
    %249 = vmatprep.mubr.f32.mxu0 0.0
    %250 = vmatmul.mubr.f32.gmra.mrb[0].mxu0 %v115
    %v251 = vpop.f32.mrb[0].mxu0
    %v252 = vadd.f32 0.0, %v251
    %v253 = vpop.f32.mrb[0].mxu0
    %254 = vmatprep.mubr.f32.mxu0 0.0
    %255 = vmatmul.mubr.f32.gmra.mrb[0].mxu0 %v118
    %v256 = vpop.f32.mrb[0].mxu0
    %v257 = vadd.f32 0.0, %v256
    %v258 = vpop.f32.mrb[0].mxu0
    %259 = vmatprep.mubr.f32.mxu0 0.0
    %260 = vmatmul.mubr.f32.gmra.mrb[0].mxu0 %v121
    %v261 = vpop.f32.mrb[0].mxu0
    %v262 = vadd.f32 0.0, %v261
    %v263 = vpop.f32.mrb[0].mxu0
    %264 = vmatprep.mubr.f32.mxu0 0.0
    %265 = vmatmul.mubr.f32.gmra.mrb[0].mxu0 %v124
    %v266 = vpop.f32.mrb[0].mxu0
    %v267 = vadd.f32 0.0, %v266
    %v268 = vpop.f32.mrb[0].mxu0
    %269 = vmatprep.mubr.f32.mxu0 0.0
    %270 = vmatmul.mubr.f32.gmra.mrb[0].mxu0 %v127
    %v271 = vpop.f32.mrb[0].mxu0
    %v272 = vadd.f32 0.0, %v271
    %v273 = vpop.f32.mrb[0].mxu0
    %274 = vmatprep.mubr.f32.mxu0 0.0
    %275 = vmatmul.mubr.f32.gmra.mrb[0].mxu0 %v130
    %v276 = vpop.f32.mrb[0].mxu0
    %v277 = vadd.f32 0.0, %v276
    %v278 = vpop.f32.mrb[0].mxu0
    %279 = vmatprep.mubr.f32.mxu0 0.0
    %280 = vmatmul.mubr.f32.gmra.mrb[0].mxu0 %v133
    %v281 = vpop.f32.mrb[0].mxu0
    %v282 = vadd.f32 0.0, %v281
    %v283 = vpop.f32.mrb[0].mxu0
    %284 = vmatprep.mubr.f32.mxu0 0.0
    %285 = vmatmul.mubr.f32.gmra.mrb[0].mxu0 %v136
    %v286 = vpop.f32.mrb[0].mxu0
    %v287 = vadd.f32 0.0, %v286
    %v288 = vpop.f32.mrb[0].mxu0
    %289 = vmatprep.mubr.f32.mxu0 0.0
    %290 = vmatmul.mubr.f32.gmra.mrb[0].mxu0 %v139
    %v291 = vpop.f32.mrb[0].mxu0
    %v292 = vadd.f32 0.0, %v291
    %v293 = vpop.f32.mrb[0].mxu0
    %294 = vmatprep.mubr.f32.mxu0 0.0
    %295 = vmatmul.mubr.f32.gmra.mrb[0].mxu0 %v142
    %v296 = vpop.f32.mrb[0].mxu0
    %v297 = vadd.f32 0.0, %v296
    %v298 = vpop.f32.mrb[0].mxu0
    %299 = vmatprep.mubr.f32.mxu0 0.0
    %300 = vmatmul.mubr.f32.gmra.mrb[0].mxu0 %v145
    %v301 = vpop.f32.mrb[0].mxu0
    %v302 = vadd.f32 0.0, %v301
    %v303 = vpop.f32.mrb[0].mxu0
    %304 = vmatprep.mubr.f32.mxu0 0.0
    %305 = vmatmul.mubr.f32.gmra.mrb[0].mxu0 %v148
    %v306 = vpop.f32.mrb[0].mxu0
    %v307 = vadd.f32 0.0, %v306
    %v308 = vpop.f32.mrb[0].mxu0
    %309 = vmatprep.mubr.f32.mxu0 0.0
    %310 = vmatmul.mubr.f32.gmra.mrb[0].mxu0 %v151
    %v311 = vpop.f32.mrb[0].mxu0
    %v312 = vadd.f32 0.0, %v311
    %v313 = vpop.f32.mrb[0].mxu0
    %314 = vmatprep.mubr.f32.mxu0 0.0
    %315 = vmatmul.mubr.f32.gmra.mrb[0].mxu0 %v154
    %v316 = vpop.f32.mrb[0].mxu0
    %v317 = vadd.f32 0.0, %v316
    %v318 = vpop.f32.mrb[0].mxu0
    %319 = vmatprep.mubr.f32.mxu0 0.0
    %320 = vmatmul.mubr.f32.gmra.mrb[0].mxu0 %v157
    %v321 = vpop.f32.mrb[0].mxu0
    %v322 = vadd.f32 0.0, %v321
    %v323 = vpop.f32.mrb[0].mxu0
    %324 = vmatprep.mubr.f32.mxu0 0.0
    %325 = vmatmul.mubr.f32.gmra.mrb[0].mxu0 %v160
    %v326 = vpop.f32.mrb[0].mxu0
    %v327 = vadd.f32 0.0, %v326
    %v328 = vpop.f32.mrb[0].mxu0
    %329 = vmatprep.mubr.f32.mxu0 0.0
    %330 = vmatmul.mubr.f32.gmra.mrb[0].mxu0 %v163
    %v331 = vpop.f32.mrb[0].mxu0
    %v332 = vadd.f32 0.0, %v331
    %v333 = vpop.f32.mrb[0].mxu0
    %334 = vmatprep.mubr.f32.mxu0 0.0
    %335 = vmatmul.mubr.f32.gmra.mrb[0].mxu0 %v166
    %v336 = vpop.f32.mrb[0].mxu0
    %v337 = vadd.f32 0.0, %v336
    %v338 = vpop.f32.mrb[0].mxu0
    %339 = vmatprep.mubr.f32.mxu0 0.0
    %340 = vmatmul.mubr.f32.gmra.mrb[0].mxu0 %v169
    %v341 = vpop.f32.mrb[0].mxu0
    %v342 = vadd.f32 0.0, %v341
    %v343 = vpop.f32.mrb[0].mxu0
    %344 = vmatprep.mubr.f32.mxu0 0.0
    %345 = vmatmul.mubr.f32.gmra.mrb[0].mxu0 %v172
    %v346 = vpop.f32.mrb[0].mxu0
    %v347 = vadd.f32 0.0, %v346
    %v348 = vpop.f32.mrb[0].mxu0
    %349 = vmatprep.mubr.f32.mxu0 0.0
    %350 = vmatmul.mubr.f32.gmra.mrb[0].mxu0 %v175
    %v351 = vpop.f32.mrb[0].mxu0
    %v352 = vadd.f32 0.0, %v351
    %v353 = vpop.f32.mrb[0].mxu0
    %354 = vmatprep.mubr.f32.mxu0 0.0
    %355 = vmatmul.mubr.f32.gmra.mrb[0].mxu0 %v178
    %v356 = vpop.f32.mrb[0].mxu0
    %v357 = vadd.f32 0.0, %v356
    %v358 = vpop.f32.mrb[0].mxu0
    %359 = vdwg.mxu0
    %v360 = vld [vmem:[%s3] sm:$0x1]
    %v362 = vlaneseq
    %v363 = vshrl.u32 %v362, 7
    %v364 = vsub.s32 0, %v363
    %v365 = vrot.slane %v360, %v364
    %vm367 = vcmask 457728
    %v369 = vsel %vm367, %v61, 0
    %v372 = vsel %vm367, %v63, 0
    %v375 = vsel %vm367, %v65, 0
    %v378 = vsel %vm367, %v67, 0
    %v381 = vsel %vm367, %v69, 0
    %v384 = vsel %vm367, %v71, 0
    %v387 = vsel %vm367, %v73, 0
    %v390 = vsel %vm367, %v75, 0
    %v393 = vsel %vm367, %v77, 0
    %v396 = vsel %vm367, %v79, 0
    %v399 = vsel %vm367, %v81, 0
    %v402 = vsel %vm367, %v83, 0
    %v405 = vsel %vm367, %v85, 0
    %v408 = vsel %vm367, %v87, 0
    %v411 = vsel %vm367, %v89, 0
    %v414 = vsel %vm367, %v91, 0
    %v417 = vsel %vm367, %v93, 0
    %v420 = vsel %vm367, %v95, 0
    %v423 = vsel %vm367, %v97, 0
    %v426 = vsel %vm367, %v99, 0
    %v429 = vsel %vm367, %v101, 0
    %v432 = vsel %vm367, %v103, 0
    %v435 = vsel %vm367, %v105, 0
    %437 = vmatprep.subr.mxu0 0.0
    %438 = vmatpush1.msra.mxu0 %v247
    %439 = vmatprep.subr.mxu0 0.0
    %440 = vmatpush1.msra.mxu0 %v252
    %441 = vmatprep.subr.mxu0 0.0
    %442 = vmatpush1.msra.mxu0 %v257
    %443 = vmatprep.subr.mxu0 0.0
    %444 = vmatpush1.msra.mxu0 %v262
    %445 = vmatprep.subr.mxu0 0.0
    %446 = vmatpush1.msra.mxu0 %v267
    %447 = vmatprep.subr.mxu0 0.0
    %448 = vmatpush1.msra.mxu0 %v272
    %449 = vmatprep.subr.mxu0 0.0
    %450 = vmatpush1.msra.mxu0 %v277
    %451 = vmatprep.subr.mxu0 0.0
    %452 = vmatpush1.msra.mxu0 %v282
    %453 = vmatprep.subr.mxu0 0.0
    %454 = vmatpush1.msra.mxu0 %v287
    %455 = vmatprep.subr.mxu0 0.0
    %456 = vmatpush1.msra.mxu0 %v292
    %457 = vmatprep.subr.mxu0 0.0
    %458 = vmatpush1.msra.mxu0 %v297
    %459 = vmatprep.subr.mxu0 0.0
    %460 = vmatpush1.msra.mxu0 %v302
    %461 = vmatprep.subr.mxu0 0.0
    %462 = vmatpush1.msra.mxu0 %v307
    %463 = vmatprep.subr.mxu0 0.0
    %464 = vmatpush1.msra.mxu0 %v312
    %465 = vmatprep.subr.mxu0 0.0
    %466 = vmatpush1.msra.mxu0 %v317
    %467 = vmatprep.subr.mxu0 0.0
    %468 = vmatpush1.msra.mxu0 %v322
    %469 = vmatprep.subr.mxu0 0.0
    %470 = vmatpush1.msra.mxu0 %v327
    %471 = vmatprep.subr.mxu0 0.0
    %472 = vmatpush1.msra.mxu0 %v332
    %473 = vmatprep.subr.mxu0 0.0
    %474 = vmatpush1.msra.mxu0 %v337
    %475 = vmatprep.subr.mxu0 0.0
    %476 = vmatpush1.msra.mxu0 %v342
    %477 = vmatprep.subr.mxu0 0.0
    %478 = vmatpush1.msra.mxu0 %v347
    %479 = vmatprep.subr.mxu0 0.0
    %480 = vmatpush1.msra.mxu0 %v352
    %481 = vmatprep.subr.mxu0 0.0
    %482 = vmatpush1.msra.mxu0 %v357
    %483 = vmatprep.subr.mxu0 0.0
    %484 = vmatpush1.msra.mxu0 0.0
    %485 = vmatprep.subr.mxu0 0.0
    %486 = vmatpush1.msra.mxu0 0.0
    %487 = vmatprep.subr.mxu0 0.0
    %488 = vmatpush1.msra.mxu0 0.0
    %489 = vmatprep.subr.mxu0 0.0
    %490 = vmatpush1.msra.mxu0 0.0
    %491 = vmatprep.subr.mxu0 0.0
    %492 = vmatpush1.msra.mxu0 0.0
    %493 = vmatprep.subr.mxu0 0.0
    %494 = vmatpush1.msra.mxu0 0.0
    %495 = vmatprep.subr.mxu0 0.0
    %496 = vmatpush1.msra.mxu0 0.0
    %497 = vmatprep.subr.mxu0 0.0
    %498 = vmatpush1.msra.mxu0 0.0
    %499 = vmatprep.subr.mxu0 0.0
    %500 = vmatpush1.msra.mxu0 0.0
    %501 = vmatprep.mubr.f32.mxu0 %v369
    %502 = vmatmul.mubr.f32.gmra.mrb[0].mxu0 %v60
    %v503 = vpop.f32.mrb[0].mxu0
    %v504 = vadd.f32 %v365, %v503
    %v505 = vpop.f32.mrb[0].mxu0
    %506 = vmatprep.mubr.f32.mxu0 %v372
    %507 = vmatmul.mubr.f32.gmra.mrb[0].mxu0 %v62
    %v508 = vpop.f32.mrb[0].mxu0
    %v509 = vadd.f32 %v365, %v508
    %v510 = vpop.f32.mrb[0].mxu0
    %511 = vmatprep.mubr.f32.mxu0 %v375
    %512 = vmatmul.mubr.f32.gmra.mrb[0].mxu0 %v64
    %v513 = vpop.f32.mrb[0].mxu0
    %v514 = vadd.f32 %v365, %v513
    %v515 = vpop.f32.mrb[0].mxu0
    %516 = vmatprep.mubr.f32.mxu0 %v378
    %517 = vmatmul.mubr.f32.gmra.mrb[0].mxu0 %v66
    %v518 = vpop.f32.mrb[0].mxu0
    %v519 = vadd.f32 %v365, %v518
    %v520 = vpop.f32.mrb[0].mxu0
    %521 = vmatprep.mubr.f32.mxu0 %v381
    %522 = vmatmul.mubr.f32.gmra.mrb[0].mxu0 %v68
    %v523 = vpop.f32.mrb[0].mxu0
    %v524 = vadd.f32 %v365, %v523
    %v525 = vpop.f32.mrb[0].mxu0
    %526 = vmatprep.mubr.f32.mxu0 %v384
    %527 = vmatmul.mubr.f32.gmra.mrb[0].mxu0 %v70
    %v528 = vpop.f32.mrb[0].mxu0
    %v529 = vadd.f32 %v365, %v528
    %v530 = vpop.f32.mrb[0].mxu0
    %531 = vmatprep.mubr.f32.mxu0 %v387
    %532 = vmatmul.mubr.f32.gmra.mrb[0].mxu0 %v72
    %v533 = vpop.f32.mrb[0].mxu0
    %v534 = vadd.f32 %v365, %v533
    %v535 = vpop.f32.mrb[0].mxu0
    %536 = vmatprep.mubr.f32.mxu0 %v390
    %537 = vmatmul.mubr.f32.gmra.mrb[0].mxu0 %v74
    %v538 = vpop.f32.mrb[0].mxu0
    %v539 = vadd.f32 %v365, %v538
    %v540 = vpop.f32.mrb[0].mxu0
    %541 = vmatprep.mubr.f32.mxu0 %v393
    %542 = vmatmul.mubr.f32.gmra.mrb[0].mxu0 %v76
    %v543 = vpop.f32.mrb[0].mxu0
    %v544 = vadd.f32 %v365, %v543
    %v545 = vpop.f32.mrb[0].mxu0
    %546 = vmatprep.mubr.f32.mxu0 %v396
    %547 = vmatmul.mubr.f32.gmra.mrb[0].mxu0 %v78
    %v548 = vpop.f32.mrb[0].mxu0
    %v549 = vadd.f32 %v365, %v548
    %v550 = vpop.f32.mrb[0].mxu0
    %551 = vmatprep.mubr.f32.mxu0 %v399
    %552 = vmatmul.mubr.f32.gmra.mrb[0].mxu0 %v80
    %v553 = vpop.f32.mrb[0].mxu0
    %v554 = vadd.f32 %v365, %v553
    %v555 = vpop.f32.mrb[0].mxu0
    %556 = vmatprep.mubr.f32.mxu0 %v402
    %557 = vmatmul.mubr.f32.gmra.mrb[0].mxu0 %v82
    %v558 = vpop.f32.mrb[0].mxu0
    %v559 = vadd.f32 %v365, %v558
    %v560 = vpop.f32.mrb[0].mxu0
    %561 = vmatprep.mubr.f32.mxu0 %v405
    %562 = vmatmul.mubr.f32.gmra.mrb[0].mxu0 %v84
    %v563 = vpop.f32.mrb[0].mxu0
    %v564 = vadd.f32 %v365, %v563
    %v565 = vpop.f32.mrb[0].mxu0
    %566 = vmatprep.mubr.f32.mxu0 %v408
    %567 = vmatmul.mubr.f32.gmra.mrb[0].mxu0 %v86
    %v568 = vpop.f32.mrb[0].mxu0
    %v569 = vadd.f32 %v365, %v568
    %v570 = vpop.f32.mrb[0].mxu0
    %571 = vmatprep.mubr.f32.mxu0 %v411
    %572 = vmatmul.mubr.f32.gmra.mrb[0].mxu0 %v88
    %v573 = vpop.f32.mrb[0].mxu0
    %v574 = vadd.f32 %v365, %v573
    %v575 = vpop.f32.mrb[0].mxu0
    %576 = vmatprep.mubr.f32.mxu0 %v414
    %577 = vmatmul.mubr.f32.gmra.mrb[0].mxu0 %v90
    %v578 = vpop.f32.mrb[0].mxu0
    %v579 = vadd.f32 %v365, %v578
    %v580 = vpop.f32.mrb[0].mxu0
    %581 = vmatprep.mubr.f32.mxu0 %v417
    %582 = vmatmul.mubr.f32.gmra.mrb[0].mxu0 %v92
    %v583 = vpop.f32.mrb[0].mxu0
    %v584 = vadd.f32 %v365, %v583
    %v585 = vpop.f32.mrb[0].mxu0
    %586 = vmatprep.mubr.f32.mxu0 %v420
    %587 = vmatmul.mubr.f32.gmra.mrb[0].mxu0 %v94
    %v588 = vpop.f32.mrb[0].mxu0
    %v589 = vadd.f32 %v365, %v588
    %v590 = vpop.f32.mrb[0].mxu0
    %591 = vmatprep.mubr.f32.mxu0 %v423
    %592 = vmatmul.mubr.f32.gmra.mrb[0].mxu0 %v96
    %v593 = vpop.f32.mrb[0].mxu0
    %v594 = vadd.f32 %v365, %v593
    %v595 = vpop.f32.mrb[0].mxu0
    %596 = vmatprep.mubr.f32.mxu0 %v426
    %597 = vmatmul.mubr.f32.gmra.mrb[0].mxu0 %v98
    %v598 = vpop.f32.mrb[0].mxu0
    %v599 = vadd.f32 %v365, %v598
    %v600 = vpop.f32.mrb[0].mxu0
    %601 = vmatprep.mubr.f32.mxu0 %v429
    %602 = vmatmul.mubr.f32.gmra.mrb[0].mxu0 %v100
    %v603 = vpop.f32.mrb[0].mxu0
    %v604 = vadd.f32 %v365, %v603
    %v605 = vpop.f32.mrb[0].mxu0
    %606 = vmatprep.mubr.f32.mxu0 %v432
    %607 = vmatmul.mubr.f32.gmra.mrb[0].mxu0 %v102
    %v608 = vpop.f32.mrb[0].mxu0
    %v609 = vadd.f32 %v365, %v608
    %v610 = vpop.f32.mrb[0].mxu0
    %611 = vmatprep.mubr.f32.mxu0 %v435
    %612 = vmatmul.mubr.f32.gmra.mrb[0].mxu0 %v104
    %v613 = vpop.f32.mrb[0].mxu0
    %v614 = vadd.f32 %v365, %v613
    %v615 = vpop.f32.mrb[0].mxu0
    %616 = vdwg.mxu0
    %v617 = vmax.f32 %v504, 0.0
    %v618 = vmax.f32 %v509, 0.0
    %v619 = vmax.f32 %v514, 0.0
    %v620 = vmax.f32 %v519, 0.0
    %v621 = vmax.f32 %v524, 0.0
    %v622 = vmax.f32 %v529, 0.0
    %v623 = vmax.f32 %v534, 0.0
    %v624 = vmax.f32 %v539, 0.0
    %v625 = vmax.f32 %v544, 0.0
    %v626 = vmax.f32 %v549, 0.0
    %v627 = vmax.f32 %v554, 0.0
    %v628 = vmax.f32 %v559, 0.0
    %v629 = vmax.f32 %v564, 0.0
    %v630 = vmax.f32 %v569, 0.0
    %v631 = vmax.f32 %v574, 0.0
    %v632 = vmax.f32 %v579, 0.0
    %v633 = vmax.f32 %v584, 0.0
    %v634 = vmax.f32 %v589, 0.0
    %v635 = vmax.f32 %v594, 0.0
    %v636 = vmax.f32 %v599, 0.0
    %v637 = vmax.f32 %v604, 0.0
    %v638 = vmax.f32 %v609, 0.0
    %v639 = vmax.f32 %v614, 0.0
    %v640 = vld [vmem:[%s4] sm:$0xff]
    %v641 = vld [vmem:[%s4 + $0x8] sm:$0xff]
    %vm642 = vcmask 130048
    %v644 = vsel %vm642, %v617, 0
    %v647 = vsel %vm642, %v618, 0
    %v650 = vsel %vm642, %v619, 0
    %v653 = vsel %vm642, %v620, 0
    %v656 = vsel %vm642, %v621, 0
    %v659 = vsel %vm642, %v622, 0
    %v662 = vsel %vm642, %v623, 0
    %v665 = vsel %vm642, %v624, 0
    %v668 = vsel %vm642, %v625, 0
    %v671 = vsel %vm642, %v626, 0
    %v674 = vsel %vm642, %v627, 0
    %v677 = vsel %vm642, %v628, 0
    %v680 = vsel %vm642, %v629, 0
    %v683 = vsel %vm642, %v630, 0
    %v686 = vsel %vm642, %v631, 0
    %v689 = vsel %vm642, %v632, 0
    %v692 = vsel %vm642, %v633, 0
    %v695 = vsel %vm642, %v634, 0
    %v698 = vsel %vm642, %v635, 0
    %v701 = vsel %vm642, %v636, 0
    %v704 = vsel %vm642, %v637, 0
    %v707 = vsel %vm642, %v638, 0
    %v710 = vsel %vm642, %v639, 0
    %712 = vmatprep.subr.mxu0 0.0
    %713 = vmatpush1.msra.mxu0 %v640
    %714 = vmatprep.subr.mxu0 0.0
    %715 = vmatpush1.msra.mxu0 %v641
    %716 = vmatprep.subr.mxu0 0.0
    %717 = vmatpush1.msra.mxu0 0.0
    %718 = vmatprep.subr.mxu0 0.0
    %719 = vmatpush1.msra.mxu0 0.0
    %720 = vmatprep.subr.mxu0 0.0
    %721 = vmatpush1.msra.mxu0 0.0
    %722 = vmatprep.subr.mxu0 0.0
    %723 = vmatpush1.msra.mxu0 0.0
    %724 = vmatprep.subr.mxu0 0.0
    %725 = vmatpush1.msra.mxu0 0.0
    %726 = vmatprep.subr.mxu0 0.0
    %727 = vmatpush1.msra.mxu0 0.0
    %728 = vmatprep.subr.mxu0 0.0
    %729 = vmatpush1.msra.mxu0 0.0
    %730 = vmatprep.subr.mxu0 0.0
    %731 = vmatpush1.msra.mxu0 0.0
    %732 = vmatprep.subr.mxu0 0.0
    %733 = vmatpush1.msra.mxu0 0.0
    %734 = vmatprep.subr.mxu0 0.0
    %735 = vmatpush1.msra.mxu0 0.0
    %736 = vmatprep.subr.mxu0 0.0
    %737 = vmatpush1.msra.mxu0 0.0
    %738 = vmatprep.subr.mxu0 0.0
    %739 = vmatpush1.msra.mxu0 0.0
    %740 = vmatprep.subr.mxu0 0.0
    %741 = vmatpush1.msra.mxu0 0.0
    %742 = vmatprep.subr.mxu0 0.0
    %743 = vmatpush1.msra.mxu0 0.0
    %744 = vmatprep.subr.mxu0 0.0
    %745 = vmatpush1.msra.mxu0 0.0
    %746 = vmatprep.subr.mxu0 0.0
    %747 = vmatpush1.msra.mxu0 0.0
    %748 = vmatprep.subr.mxu0 0.0
    %749 = vmatpush1.msra.mxu0 0.0
    %750 = vmatprep.subr.mxu0 0.0
    %751 = vmatpush1.msra.mxu0 0.0
    %752 = vmatprep.subr.mxu0 0.0
    %753 = vmatpush1.msra.mxu0 0.0
    %754 = vmatprep.subr.mxu0 0.0
    %755 = vmatpush1.msra.mxu0 0.0
    %756 = vmatprep.subr.mxu0 0.0
    %757 = vmatpush1.msra.mxu0 0.0
    %758 = vmatprep.subr.mxu0 0.0
    %759 = vmatpush1.msra.mxu0 0.0
    %760 = vmatprep.subr.mxu0 0.0
    %761 = vmatpush1.msra.mxu0 0.0
    %762 = vmatprep.subr.mxu0 0.0
    %763 = vmatpush1.msra.mxu0 0.0
    %764 = vmatprep.subr.mxu0 0.0
    %765 = vmatpush1.msra.mxu0 0.0
    %766 = vmatprep.subr.mxu0 0.0
    %767 = vmatpush1.msra.mxu0 0.0
    %768 = vmatprep.subr.mxu0 0.0
    %769 = vmatpush1.msra.mxu0 0.0
    %770 = vmatprep.subr.mxu0 0.0
    %771 = vmatpush1.msra.mxu0 0.0
    %772 = vmatprep.subr.mxu0 0.0
    %773 = vmatpush1.msra.mxu0 0.0
    %774 = vmatprep.subr.mxu0 0.0
    %775 = vmatpush1.msra.mxu0 0.0
    %776 = vmatprep.mubr.f32.mxu0 0.0
    %777 = vmatmul.mubr.f32.gmra.mrb[0].mxu0 %v644
    %v778 = vpop.f32.mrb[0].mxu0
    %v779 = vadd.f32 0.0, %v778
    %v780 = vpop.f32.mrb[0].mxu0
    %781 = vmatprep.mubr.f32.mxu0 0.0
    %782 = vmatmul.mubr.f32.gmra.mrb[0].mxu0 %v647
    %v783 = vpop.f32.mrb[0].mxu0
    %v784 = vadd.f32 0.0, %v783
    %v785 = vpop.f32.mrb[0].mxu0
    %786 = vmatprep.mubr.f32.mxu0 0.0
    %787 = vmatmul.mubr.f32.gmra.mrb[0].mxu0 %v650
    %v788 = vpop.f32.mrb[0].mxu0
    %v789 = vadd.f32 0.0, %v788
    %v790 = vpop.f32.mrb[0].mxu0
    %791 = vmatprep.mubr.f32.mxu0 0.0
    %792 = vmatmul.mubr.f32.gmra.mrb[0].mxu0 %v653
    %v793 = vpop.f32.mrb[0].mxu0
    %v794 = vadd.f32 0.0, %v793
    %v795 = vpop.f32.mrb[0].mxu0
    %796 = vmatprep.mubr.f32.mxu0 0.0
    %797 = vmatmul.mubr.f32.gmra.mrb[0].mxu0 %v656
    %v798 = vpop.f32.mrb[0].mxu0
    %v799 = vadd.f32 0.0, %v798
    %v800 = vpop.f32.mrb[0].mxu0
    %801 = vmatprep.mubr.f32.mxu0 0.0
    %802 = vmatmul.mubr.f32.gmra.mrb[0].mxu0 %v659
    %v803 = vpop.f32.mrb[0].mxu0
    %v804 = vadd.f32 0.0, %v803
    %v805 = vpop.f32.mrb[0].mxu0
    %806 = vmatprep.mubr.f32.mxu0 0.0
    %807 = vmatmul.mubr.f32.gmra.mrb[0].mxu0 %v662
    %v808 = vpop.f32.mrb[0].mxu0
    %v809 = vadd.f32 0.0, %v808
    %v810 = vpop.f32.mrb[0].mxu0
    %811 = vmatprep.mubr.f32.mxu0 0.0
    %812 = vmatmul.mubr.f32.gmra.mrb[0].mxu0 %v665
    %v813 = vpop.f32.mrb[0].mxu0
    %v814 = vadd.f32 0.0, %v813
    %v815 = vpop.f32.mrb[0].mxu0
    %816 = vmatprep.mubr.f32.mxu0 0.0
    %817 = vmatmul.mubr.f32.gmra.mrb[0].mxu0 %v668
    %v818 = vpop.f32.mrb[0].mxu0
    %v819 = vadd.f32 0.0, %v818
    %v820 = vpop.f32.mrb[0].mxu0
    %821 = vmatprep.mubr.f32.mxu0 0.0
    %822 = vmatmul.mubr.f32.gmra.mrb[0].mxu0 %v671
    %v823 = vpop.f32.mrb[0].mxu0
    %v824 = vadd.f32 0.0, %v823
    %v825 = vpop.f32.mrb[0].mxu0
    %826 = vmatprep.mubr.f32.mxu0 0.0
    %827 = vmatmul.mubr.f32.gmra.mrb[0].mxu0 %v674
    %v828 = vpop.f32.mrb[0].mxu0
    %v829 = vadd.f32 0.0, %v828
    %v830 = vpop.f32.mrb[0].mxu0
    %831 = vmatprep.mubr.f32.mxu0 0.0
    %832 = vmatmul.mubr.f32.gmra.mrb[0].mxu0 %v677
    %v833 = vpop.f32.mrb[0].mxu0
    %v834 = vadd.f32 0.0, %v833
    %v835 = vpop.f32.mrb[0].mxu0
    %836 = vmatprep.mubr.f32.mxu0 0.0
    %837 = vmatmul.mubr.f32.gmra.mrb[0].mxu0 %v680
    %v838 = vpop.f32.mrb[0].mxu0
    %v839 = vadd.f32 0.0, %v838
    %v840 = vpop.f32.mrb[0].mxu0
    %841 = vmatprep.mubr.f32.mxu0 0.0
    %842 = vmatmul.mubr.f32.gmra.mrb[0].mxu0 %v683
    %v843 = vpop.f32.mrb[0].mxu0
    %v844 = vadd.f32 0.0, %v843
    %v845 = vpop.f32.mrb[0].mxu0
    %846 = vmatprep.mubr.f32.mxu0 0.0
    %847 = vmatmul.mubr.f32.gmra.mrb[0].mxu0 %v686
    %v848 = vpop.f32.mrb[0].mxu0
    %v849 = vadd.f32 0.0, %v848
    %v850 = vpop.f32.mrb[0].mxu0
    %851 = vmatprep.mubr.f32.mxu0 0.0
    %852 = vmatmul.mubr.f32.gmra.mrb[0].mxu0 %v689
    %v853 = vpop.f32.mrb[0].mxu0
    %v854 = vadd.f32 0.0, %v853
    %v855 = vpop.f32.mrb[0].mxu0
    %856 = vmatprep.mubr.f32.mxu0 0.0
    %857 = vmatmul.mubr.f32.gmra.mrb[0].mxu0 %v692
    %v858 = vpop.f32.mrb[0].mxu0
    %v859 = vadd.f32 0.0, %v858
    %v860 = vpop.f32.mrb[0].mxu0
    %861 = vmatprep.mubr.f32.mxu0 0.0
    %862 = vmatmul.mubr.f32.gmra.mrb[0].mxu0 %v695
    %v863 = vpop.f32.mrb[0].mxu0
    %v864 = vadd.f32 0.0, %v863
    %v865 = vpop.f32.mrb[0].mxu0
    %866 = vmatprep.mubr.f32.mxu0 0.0
    %867 = vmatmul.mubr.f32.gmra.mrb[0].mxu0 %v698
    %v868 = vpop.f32.mrb[0].mxu0
    %v869 = vadd.f32 0.0, %v868
    %v870 = vpop.f32.mrb[0].mxu0
    %871 = vmatprep.mubr.f32.mxu0 0.0
    %872 = vmatmul.mubr.f32.gmra.mrb[0].mxu0 %v701
    %v873 = vpop.f32.mrb[0].mxu0
    %v874 = vadd.f32 0.0, %v873
    %v875 = vpop.f32.mrb[0].mxu0
    %876 = vmatprep.mubr.f32.mxu0 0.0
    %877 = vmatmul.mubr.f32.gmra.mrb[0].mxu0 %v704
    %v878 = vpop.f32.mrb[0].mxu0
    %v879 = vadd.f32 0.0, %v878
    %v880 = vpop.f32.mrb[0].mxu0
    %881 = vmatprep.mubr.f32.mxu0 0.0
    %882 = vmatmul.mubr.f32.gmra.mrb[0].mxu0 %v707
    %v883 = vpop.f32.mrb[0].mxu0
    %v884 = vadd.f32 0.0, %v883
    %v885 = vpop.f32.mrb[0].mxu0
    %886 = vmatprep.mubr.f32.mxu0 0.0
    %887 = vmatmul.mubr.f32.gmra.mrb[0].mxu0 %v710
    %v888 = vpop.f32.mrb[0].mxu0
    %v889 = vadd.f32 0.0, %v888
    %v890 = vpop.f32.mrb[0].mxu0
    %891 = vdwg.mxu0
    %v892 = vld [vmem:[%s5] sm:$0x1]
    %v894 = vlaneseq
    %v895 = vshrl.u32 %v894, 7
    %v896 = vsub.s32 0, %v895
    %v897 = vrot.slane %v892, %v896
    %899 = vmatprep.subr.mxu0 0.0
    %900 = vmatpush1.msra.mxu0 %v779
    %901 = vmatprep.subr.mxu0 0.0
    %902 = vmatpush1.msra.mxu0 %v784
    %903 = vmatprep.subr.mxu0 0.0
    %904 = vmatpush1.msra.mxu0 %v789
    %905 = vmatprep.subr.mxu0 0.0
    %906 = vmatpush1.msra.mxu0 %v794
    %907 = vmatprep.subr.mxu0 0.0
    %908 = vmatpush1.msra.mxu0 %v799
    %909 = vmatprep.subr.mxu0 0.0
    %910 = vmatpush1.msra.mxu0 %v804
    %911 = vmatprep.subr.mxu0 0.0
    %912 = vmatpush1.msra.mxu0 %v809
    %913 = vmatprep.subr.mxu0 0.0
    %914 = vmatpush1.msra.mxu0 %v814
    %915 = vmatprep.subr.mxu0 0.0
    %916 = vmatpush1.msra.mxu0 %v819
    %917 = vmatprep.subr.mxu0 0.0
    %918 = vmatpush1.msra.mxu0 %v824
    %919 = vmatprep.subr.mxu0 0.0
    %920 = vmatpush1.msra.mxu0 %v829
    %921 = vmatprep.subr.mxu0 0.0
    %922 = vmatpush1.msra.mxu0 %v834
    %923 = vmatprep.subr.mxu0 0.0
    %924 = vmatpush1.msra.mxu0 %v839
    %925 = vmatprep.subr.mxu0 0.0
    %926 = vmatpush1.msra.mxu0 %v844
    %927 = vmatprep.subr.mxu0 0.0
    %928 = vmatpush1.msra.mxu0 %v849
    %929 = vmatprep.subr.mxu0 0.0
    %930 = vmatpush1.msra.mxu0 %v854
    %931 = vmatprep.subr.mxu0 0.0
    %932 = vmatpush1.msra.mxu0 %v859
    %933 = vmatprep.subr.mxu0 0.0
    %934 = vmatpush1.msra.mxu0 %v864
    %935 = vmatprep.subr.mxu0 0.0
    %936 = vmatpush1.msra.mxu0 %v869
    %937 = vmatprep.subr.mxu0 0.0
    %938 = vmatpush1.msra.mxu0 %v874
    %939 = vmatprep.subr.mxu0 0.0
    %940 = vmatpush1.msra.mxu0 %v879
    %941 = vmatprep.subr.mxu0 0.0
    %942 = vmatpush1.msra.mxu0 %v884
    %943 = vmatprep.subr.mxu0 0.0
    %944 = vmatpush1.msra.mxu0 %v889
    %945 = vmatprep.subr.mxu0 0.0
    %946 = vmatpush1.msra.mxu0 0.0
    %947 = vmatprep.subr.mxu0 0.0
    %948 = vmatpush1.msra.mxu0 0.0
    %949 = vmatprep.subr.mxu0 0.0
    %950 = vmatpush1.msra.mxu0 0.0
    %951 = vmatprep.subr.mxu0 0.0
    %952 = vmatpush1.msra.mxu0 0.0
    %953 = vmatprep.subr.mxu0 0.0
    %954 = vmatpush1.msra.mxu0 0.0
    %955 = vmatprep.subr.mxu0 0.0
    %956 = vmatpush1.msra.mxu0 0.0
    %957 = vmatprep.subr.mxu0 0.0
    %958 = vmatpush1.msra.mxu0 0.0
    %959 = vmatprep.subr.mxu0 0.0
    %960 = vmatpush1.msra.mxu0 0.0
    %961 = vmatprep.subr.mxu0 0.0
    %962 = vmatpush1.msra.mxu0 0.0
    %963 = vmatprep.mubr.f32.mxu0 %v369
    %964 = vmatmul.mubr.f32.gmra.mrb[0].mxu0 %v60
    %v965 = vpop.f32.mrb[0].mxu0
    %v966 = vadd.f32 %v897, %v965
    %v967 = vpop.f32.mrb[0].mxu0
    %968 = vmatprep.mubr.f32.mxu0 %v372
    %969 = vmatmul.mubr.f32.gmra.mrb[0].mxu0 %v62
    %v970 = vpop.f32.mrb[0].mxu0
    %v971 = vadd.f32 %v897, %v970
    %v972 = vpop.f32.mrb[0].mxu0
    %973 = vmatprep.mubr.f32.mxu0 %v375
    %974 = vmatmul.mubr.f32.gmra.mrb[0].mxu0 %v64
    %v975 = vpop.f32.mrb[0].mxu0
    %v976 = vadd.f32 %v897, %v975
    %v977 = vpop.f32.mrb[0].mxu0
    %978 = vmatprep.mubr.f32.mxu0 %v378
    %979 = vmatmul.mubr.f32.gmra.mrb[0].mxu0 %v66
    %v980 = vpop.f32.mrb[0].mxu0
    %v981 = vadd.f32 %v897, %v980
    %v982 = vpop.f32.mrb[0].mxu0
    %983 = vmatprep.mubr.f32.mxu0 %v381
    %984 = vmatmul.mubr.f32.gmra.mrb[0].mxu0 %v68
    %v985 = vpop.f32.mrb[0].mxu0
    %v986 = vadd.f32 %v897, %v985
    %v987 = vpop.f32.mrb[0].mxu0
    %988 = vmatprep.mubr.f32.mxu0 %v384
    %989 = vmatmul.mubr.f32.gmra.mrb[0].mxu0 %v70
    %v990 = vpop.f32.mrb[0].mxu0
    %v991 = vadd.f32 %v897, %v990
    %v992 = vpop.f32.mrb[0].mxu0
    %993 = vmatprep.mubr.f32.mxu0 %v387
    %994 = vmatmul.mubr.f32.gmra.mrb[0].mxu0 %v72
    %v995 = vpop.f32.mrb[0].mxu0
    %v996 = vadd.f32 %v897, %v995
    %v997 = vpop.f32.mrb[0].mxu0
    %998 = vmatprep.mubr.f32.mxu0 %v390
    %999 = vmatmul.mubr.f32.gmra.mrb[0].mxu0 %v74
    %v1000 = vpop.f32.mrb[0].mxu0
    %v1001 = vadd.f32 %v897, %v1000
    %v1002 = vpop.f32.mrb[0].mxu0
    %1003 = vmatprep.mubr.f32.mxu0 %v393
    %1004 = vmatmul.mubr.f32.gmra.mrb[0].mxu0 %v76
    %v1005 = vpop.f32.mrb[0].mxu0
    %v1006 = vadd.f32 %v897, %v1005
    %v1007 = vpop.f32.mrb[0].mxu0
    %1008 = vmatprep.mubr.f32.mxu0 %v396
    %1009 = vmatmul.mubr.f32.gmra.mrb[0].mxu0 %v78
    %v1010 = vpop.f32.mrb[0].mxu0
    %v1011 = vadd.f32 %v897, %v1010
    %v1012 = vpop.f32.mrb[0].mxu0
    %1013 = vmatprep.mubr.f32.mxu0 %v399
    %1014 = vmatmul.mubr.f32.gmra.mrb[0].mxu0 %v80
    %v1015 = vpop.f32.mrb[0].mxu0
    %v1016 = vadd.f32 %v897, %v1015
    %v1017 = vpop.f32.mrb[0].mxu0
    %1018 = vmatprep.mubr.f32.mxu0 %v402
    %1019 = vmatmul.mubr.f32.gmra.mrb[0].mxu0 %v82
    %v1020 = vpop.f32.mrb[0].mxu0
    %v1021 = vadd.f32 %v897, %v1020
    %v1022 = vpop.f32.mrb[0].mxu0
    %1023 = vmatprep.mubr.f32.mxu0 %v405
    %1024 = vmatmul.mubr.f32.gmra.mrb[0].mxu0 %v84
    %v1025 = vpop.f32.mrb[0].mxu0
    %v1026 = vadd.f32 %v897, %v1025
    %v1027 = vpop.f32.mrb[0].mxu0
    %1028 = vmatprep.mubr.f32.mxu0 %v408
    %1029 = vmatmul.mubr.f32.gmra.mrb[0].mxu0 %v86
    %v1030 = vpop.f32.mrb[0].mxu0
    %v1031 = vadd.f32 %v897, %v1030
    %v1032 = vpop.f32.mrb[0].mxu0
    %1033 = vmatprep.mubr.f32.mxu0 %v411
    %1034 = vmatmul.mubr.f32.gmra.mrb[0].mxu0 %v88
    %v1035 = vpop.f32.mrb[0].mxu0
    %v1036 = vadd.f32 %v897, %v1035
    %v1037 = vpop.f32.mrb[0].mxu0
    %1038 = vmatprep.mubr.f32.mxu0 %v414
    %1039 = vmatmul.mubr.f32.gmra.mrb[0].mxu0 %v90
    %v1040 = vpop.f32.mrb[0].mxu0
    %v1041 = vadd.f32 %v897, %v1040
    %v1042 = vpop.f32.mrb[0].mxu0
    %1043 = vmatprep.mubr.f32.mxu0 %v417
    %1044 = vmatmul.mubr.f32.gmra.mrb[0].mxu0 %v92
    %v1045 = vpop.f32.mrb[0].mxu0
    %v1046 = vadd.f32 %v897, %v1045
    %v1047 = vpop.f32.mrb[0].mxu0
    %1048 = vmatprep.mubr.f32.mxu0 %v420
    %1049 = vmatmul.mubr.f32.gmra.mrb[0].mxu0 %v94
    %v1050 = vpop.f32.mrb[0].mxu0
    %v1051 = vadd.f32 %v897, %v1050
    %v1052 = vpop.f32.mrb[0].mxu0
    %1053 = vmatprep.mubr.f32.mxu0 %v423
    %1054 = vmatmul.mubr.f32.gmra.mrb[0].mxu0 %v96
    %v1055 = vpop.f32.mrb[0].mxu0
    %v1056 = vadd.f32 %v897, %v1055
    %v1057 = vpop.f32.mrb[0].mxu0
    %1058 = vmatprep.mubr.f32.mxu0 %v426
    %1059 = vmatmul.mubr.f32.gmra.mrb[0].mxu0 %v98
    %v1060 = vpop.f32.mrb[0].mxu0
    %v1061 = vadd.f32 %v897, %v1060
    %v1062 = vpop.f32.mrb[0].mxu0
    %1063 = vmatprep.mubr.f32.mxu0 %v429
    %1064 = vmatmul.mubr.f32.gmra.mrb[0].mxu0 %v100
    %v1065 = vpop.f32.mrb[0].mxu0
    %v1066 = vadd.f32 %v897, %v1065
    %v1067 = vpop.f32.mrb[0].mxu0
    %1068 = vmatprep.mubr.f32.mxu0 %v432
    %1069 = vmatmul.mubr.f32.gmra.mrb[0].mxu0 %v102
    %v1070 = vpop.f32.mrb[0].mxu0
    %v1071 = vadd.f32 %v897, %v1070
    %v1072 = vpop.f32.mrb[0].mxu0
    %1073 = vmatprep.mubr.f32.mxu0 %v435
    %1074 = vmatmul.mubr.f32.gmra.mrb[0].mxu0 %v104
    %v1075 = vpop.f32.mrb[0].mxu0
    %v1076 = vadd.f32 %v897, %v1075
    %v1077 = vpop.f32.mrb[0].mxu0
    %1078 = vdwg.mxu0
    %v1079 = vsel %vm110, %v966, -inf
    %1080 = vmax.xlane.f32.xlu0 %v1079
    %v1081 = vpop.xlane.xlu0 %1080
    %v1082 = vsel %vm110, %v971, -inf
    %1083 = vmax.xlane.f32.xlu0 %v1082
    %v1084 = vpop.xlane.xlu0 %1083
    %v1085 = vsel %vm110, %v976, -inf
    %1086 = vmax.xlane.f32.xlu0 %v1085
    %v1087 = vpop.xlane.xlu0 %1086
    %v1088 = vsel %vm110, %v981, -inf
    %1089 = vmax.xlane.f32.xlu0 %v1088
    %v1090 = vpop.xlane.xlu0 %1089
    %v1091 = vsel %vm110, %v986, -inf
    %1092 = vmax.xlane.f32.xlu0 %v1091
    %v1093 = vpop.xlane.xlu0 %1092
    %v1094 = vsel %vm110, %v991, -inf
    %1095 = vmax.xlane.f32.xlu0 %v1094
    %v1096 = vpop.xlane.xlu0 %1095
    %v1097 = vsel %vm110, %v996, -inf
    %1098 = vmax.xlane.f32.xlu0 %v1097
    %v1099 = vpop.xlane.xlu0 %1098
    %v1100 = vsel %vm110, %v1001, -inf
    %1101 = vmax.xlane.f32.xlu0 %v1100
    %v1102 = vpop.xlane.xlu0 %1101
    %v1103 = vsel %vm110, %v1006, -inf
    %1104 = vmax.xlane.f32.xlu0 %v1103
    %v1105 = vpop.xlane.xlu0 %1104
    %v1106 = vsel %vm110, %v1011, -inf
    %1107 = vmax.xlane.f32.xlu0 %v1106
    %v1108 = vpop.xlane.xlu0 %1107
    %v1109 = vsel %vm110, %v1016, -inf
    %1110 = vmax.xlane.f32.xlu0 %v1109
    %v1111 = vpop.xlane.xlu0 %1110
    %v1112 = vsel %vm110, %v1021, -inf
    %1113 = vmax.xlane.f32.xlu0 %v1112
    %v1114 = vpop.xlane.xlu0 %1113
    %v1115 = vsel %vm110, %v1026, -inf
    %1116 = vmax.xlane.f32.xlu0 %v1115
    %v1117 = vpop.xlane.xlu0 %1116
    %v1118 = vsel %vm110, %v1031, -inf
    %1119 = vmax.xlane.f32.xlu0 %v1118
    %v1120 = vpop.xlane.xlu0 %1119
    %v1121 = vsel %vm110, %v1036, -inf
    %1122 = vmax.xlane.f32.xlu0 %v1121
    %v1123 = vpop.xlane.xlu0 %1122
    %v1124 = vsel %vm110, %v1041, -inf
    %1125 = vmax.xlane.f32.xlu0 %v1124
    %v1126 = vpop.xlane.xlu0 %1125
    %v1127 = vsel %vm110, %v1046, -inf
    %1128 = vmax.xlane.f32.xlu0 %v1127
    %v1129 = vpop.xlane.xlu0 %1128
    %v1130 = vsel %vm110, %v1051, -inf
    %1131 = vmax.xlane.f32.xlu0 %v1130
    %v1132 = vpop.xlane.xlu0 %1131
    %v1133 = vsel %vm110, %v1056, -inf
    %1134 = vmax.xlane.f32.xlu0 %v1133
    %v1135 = vpop.xlane.xlu0 %1134
    %v1136 = vsel %vm110, %v1061, -inf
    %1137 = vmax.xlane.f32.xlu0 %v1136
    %v1138 = vpop.xlane.xlu0 %1137
    %v1139 = vsel %vm110, %v1066, -inf
    %1140 = vmax.xlane.f32.xlu0 %v1139
    %v1141 = vpop.xlane.xlu0 %1140
    %v1142 = vsel %vm110, %v1071, -inf
    %1143 = vmax.xlane.f32.xlu0 %v1142
    %v1144 = vpop.xlane.xlu0 %1143
    %v1145 = vsel %vm110, %v1076, -inf
    %1146 = vmax.xlane.f32.xlu0 %v1145
    %v1147 = vpop.xlane.xlu0 %1146
    %v1148 = vsub.f32 %v966, %v1081
    %v1149 = vsub.f32 %v971, %v1084
    %v1150 = vsub.f32 %v976, %v1087
    %v1151 = vsub.f32 %v981, %v1090
    %v1152 = vsub.f32 %v986, %v1093
    %v1153 = vsub.f32 %v991, %v1096
    %v1154 = vsub.f32 %v996, %v1099
    %v1155 = vsub.f32 %v1001, %v1102
    %v1156 = vsub.f32 %v1006, %v1105
    %v1157 = vsub.f32 %v1011, %v1108
    %v1158 = vsub.f32 %v1016, %v1111
    %v1159 = vsub.f32 %v1021, %v1114
    %v1160 = vsub.f32 %v1026, %v1117
    %v1161 = vsub.f32 %v1031, %v1120
    %v1162 = vsub.f32 %v1036, %v1123
    %v1163 = vsub.f32 %v1041, %v1126
    %v1164 = vsub.f32 %v1046, %v1129
    %v1165 = vsub.f32 %v1051, %v1132
    %v1166 = vsub.f32 %v1056, %v1135
    %v1167 = vsub.f32 %v1061, %v1138
    %v1168 = vsub.f32 %v1066, %v1141
    %v1169 = vsub.f32 %v1071, %v1144
    %v1170 = vsub.f32 %v1076, %v1147
    %v1171 = vmul.f32 %v1148, 1.442695
    %v1172 = vpow.pop %v1171
    %v1173 = vmul.f32 %v1149, 1.442695
    %v1174 = vpow.pop %v1173
    %v1175 = vmul.f32 %v1150, 1.442695
    %v1176 = vpow.pop %v1175
    %v1177 = vmul.f32 %v1151, 1.442695
    %v1178 = vpow.pop %v1177
    %v1179 = vmul.f32 %v1152, 1.442695
    %v1180 = vpow.pop %v1179
    %v1181 = vmul.f32 %v1153, 1.442695
    %v1182 = vpow.pop %v1181
    %v1183 = vmul.f32 %v1154, 1.442695
    %v1184 = vpow.pop %v1183
    %v1185 = vmul.f32 %v1155, 1.442695
    %v1186 = vpow.pop %v1185
    %v1187 = vmul.f32 %v1156, 1.442695
    %v1188 = vpow.pop %v1187
    %v1189 = vmul.f32 %v1157, 1.442695
    %v1190 = vpow.pop %v1189
    %v1191 = vmul.f32 %v1158, 1.442695
    %v1192 = vpow.pop %v1191
    %v1193 = vmul.f32 %v1159, 1.442695
    %v1194 = vpow.pop %v1193
    %v1195 = vmul.f32 %v1160, 1.442695
    %v1196 = vpow.pop %v1195
    %v1197 = vmul.f32 %v1161, 1.442695
    %v1198 = vpow.pop %v1197
    %v1199 = vmul.f32 %v1162, 1.442695
    %v1200 = vpow.pop %v1199
    %v1201 = vmul.f32 %v1163, 1.442695
    %v1202 = vpow.pop %v1201
    %v1203 = vmul.f32 %v1164, 1.442695
    %v1204 = vpow.pop %v1203
    %v1205 = vmul.f32 %v1165, 1.442695
    %v1206 = vpow.pop %v1205
    %v1207 = vmul.f32 %v1166, 1.442695
    %v1208 = vpow.pop %v1207
    %v1209 = vmul.f32 %v1167, 1.442695
    %v1210 = vpow.pop %v1209
    %v1211 = vmul.f32 %v1168, 1.442695
    %v1212 = vpow.pop %v1211
    %v1213 = vmul.f32 %v1169, 1.442695
    %v1214 = vpow.pop %v1213
    %v1215 = vmul.f32 %v1170, 1.442695
    %v1216 = vpow.pop %v1215
    %v1217 = vsel %vm110, %v1172, 0.0
    %1218 = vadd.xlane.f32.xlu0 %v1217
    %v1219 = vpop.xlane.xlu0 %1218
    %v1220 = vsel %vm110, %v1174, 0.0
    %1221 = vadd.xlane.f32.xlu0 %v1220
    %v1222 = vpop.xlane.xlu0 %1221
    %v1223 = vsel %vm110, %v1176, 0.0
    %1224 = vadd.xlane.f32.xlu0 %v1223
    %v1225 = vpop.xlane.xlu0 %1224
    %v1226 = vsel %vm110, %v1178, 0.0
    %1227 = vadd.xlane.f32.xlu0 %v1226
    %v1228 = vpop.xlane.xlu0 %1227
    %v1229 = vsel %vm110, %v1180, 0.0
    %1230 = vadd.xlane.f32.xlu0 %v1229
    %v1231 = vpop.xlane.xlu0 %1230
    %v1232 = vsel %vm110, %v1182, 0.0
    %1233 = vadd.xlane.f32.xlu0 %v1232
    %v1234 = vpop.xlane.xlu0 %1233
    %v1235 = vsel %vm110, %v1184, 0.0
    %1236 = vadd.xlane.f32.xlu0 %v1235
    %v1237 = vpop.xlane.xlu0 %1236
    %v1238 = vsel %vm110, %v1186, 0.0
    %1239 = vadd.xlane.f32.xlu0 %v1238
    %v1240 = vpop.xlane.xlu0 %1239
    %v1241 = vsel %vm110, %v1188, 0.0
    %1242 = vadd.xlane.f32.xlu0 %v1241
    %v1243 = vpop.xlane.xlu0 %1242
    %v1244 = vsel %vm110, %v1190, 0.0
    %1245 = vadd.xlane.f32.xlu0 %v1244
    %v1246 = vpop.xlane.xlu0 %1245
    %v1247 = vsel %vm110, %v1192, 0.0
    %1248 = vadd.xlane.f32.xlu0 %v1247
    %v1249 = vpop.xlane.xlu0 %1248
    %v1250 = vsel %vm110, %v1194, 0.0
    %1251 = vadd.xlane.f32.xlu0 %v1250
    %v1252 = vpop.xlane.xlu0 %1251
    %v1253 = vsel %vm110, %v1196, 0.0
    %1254 = vadd.xlane.f32.xlu0 %v1253
    %v1255 = vpop.xlane.xlu0 %1254
    %v1256 = vsel %vm110, %v1198, 0.0
    %1257 = vadd.xlane.f32.xlu0 %v1256
    %v1258 = vpop.xlane.xlu0 %1257
    %v1259 = vsel %vm110, %v1200, 0.0
    %1260 = vadd.xlane.f32.xlu0 %v1259
    %v1261 = vpop.xlane.xlu0 %1260
    %v1262 = vsel %vm110, %v1202, 0.0
    %1263 = vadd.xlane.f32.xlu0 %v1262
    %v1264 = vpop.xlane.xlu0 %1263
    %v1265 = vsel %vm110, %v1204, 0.0
    %1266 = vadd.xlane.f32.xlu0 %v1265
    %v1267 = vpop.xlane.xlu0 %1266
    %v1268 = vsel %vm110, %v1206, 0.0
    %1269 = vadd.xlane.f32.xlu0 %v1268
    %v1270 = vpop.xlane.xlu0 %1269
    %v1271 = vsel %vm110, %v1208, 0.0
    %1272 = vadd.xlane.f32.xlu0 %v1271
    %v1273 = vpop.xlane.xlu0 %1272
    %v1274 = vsel %vm110, %v1210, 0.0
    %1275 = vadd.xlane.f32.xlu0 %v1274
    %v1276 = vpop.xlane.xlu0 %1275
    %v1277 = vsel %vm110, %v1212, 0.0
    %1278 = vadd.xlane.f32.xlu0 %v1277
    %v1279 = vpop.xlane.xlu0 %1278
    %v1280 = vsel %vm110, %v1214, 0.0
    %1281 = vadd.xlane.f32.xlu0 %v1280
    %v1282 = vpop.xlane.xlu0 %1281
    %v1283 = vsel %vm110, %v1216, 0.0
    %1284 = vadd.xlane.f32.xlu0 %v1283
    %v1285 = vpop.xlane.xlu0 %1284
    %v1286 = vlog2.pop %v1219
    %v1287 = vmul.f32 %v1286, 0.6931472
    %v1288 = vlog2.pop %v1222
    %v1289 = vmul.f32 %v1288, 0.6931472
    %v1290 = vlog2.pop %v1225
    %v1291 = vmul.f32 %v1290, 0.6931472
    %v1292 = vlog2.pop %v1228
    %v1293 = vmul.f32 %v1292, 0.6931472
    %v1294 = vlog2.pop %v1231
    %v1295 = vmul.f32 %v1294, 0.6931472
    %v1296 = vlog2.pop %v1234
    %v1297 = vmul.f32 %v1296, 0.6931472
    %v1298 = vlog2.pop %v1237
    %v1299 = vmul.f32 %v1298, 0.6931472
    %v1300 = vlog2.pop %v1240
    %v1301 = vmul.f32 %v1300, 0.6931472
    %v1302 = vlog2.pop %v1243
    %v1303 = vmul.f32 %v1302, 0.6931472
    %v1304 = vlog2.pop %v1246
    %v1305 = vmul.f32 %v1304, 0.6931472
    %v1306 = vlog2.pop %v1249
    %v1307 = vmul.f32 %v1306, 0.6931472
    %v1308 = vlog2.pop %v1252
    %v1309 = vmul.f32 %v1308, 0.6931472
    %v1310 = vlog2.pop %v1255
    %v1311 = vmul.f32 %v1310, 0.6931472
    %v1312 = vlog2.pop %v1258
    %v1313 = vmul.f32 %v1312, 0.6931472
    %v1314 = vlog2.pop %v1261
    %v1315 = vmul.f32 %v1314, 0.6931472
    %v1316 = vlog2.pop %v1264
    %v1317 = vmul.f32 %v1316, 0.6931472
    %v1318 = vlog2.pop %v1267
    %v1319 = vmul.f32 %v1318, 0.6931472
    %v1320 = vlog2.pop %v1270
    %v1321 = vmul.f32 %v1320, 0.6931472
    %v1322 = vlog2.pop %v1273
    %v1323 = vmul.f32 %v1322, 0.6931472
    %v1324 = vlog2.pop %v1276
    %v1325 = vmul.f32 %v1324, 0.6931472
    %v1326 = vlog2.pop %v1279
    %v1327 = vmul.f32 %v1326, 0.6931472
    %v1328 = vlog2.pop %v1282
    %v1329 = vmul.f32 %v1328, 0.6931472
    %v1330 = vlog2.pop %v1285
    %v1331 = vmul.f32 %v1330, 0.6931472
    %v1332 = vsub.f32 %v1148, %v1287
    %v1333 = vsub.f32 %v1149, %v1289
    %v1334 = vsub.f32 %v1150, %v1291
    %v1335 = vsub.f32 %v1151, %v1293
    %v1336 = vsub.f32 %v1152, %v1295
    %v1337 = vsub.f32 %v1153, %v1297
    %v1338 = vsub.f32 %v1154, %v1299
    %v1339 = vsub.f32 %v1155, %v1301
    %v1340 = vsub.f32 %v1156, %v1303
    %v1341 = vsub.f32 %v1157, %v1305
    %v1342 = vsub.f32 %v1158, %v1307
    %v1343 = vsub.f32 %v1159, %v1309
    %v1344 = vsub.f32 %v1160, %v1311
    %v1345 = vsub.f32 %v1161, %v1313
    %v1346 = vsub.f32 %v1162, %v1315
    %v1347 = vsub.f32 %v1163, %v1317
    %v1348 = vsub.f32 %v1164, %v1319
    %v1349 = vsub.f32 %v1165, %v1321
    %v1350 = vsub.f32 %v1166, %v1323
    %v1351 = vsub.f32 %v1167, %v1325
    %v1352 = vsub.f32 %v1168, %v1327
    %v1353 = vsub.f32 %v1169, %v1329
    %v1354 = vsub.f32 %v1170, %v1331
    %1355 = vst.msk [vmem:[%s6] sm:$0xff] %vm110, %v1332
    %1356 = vst.msk [vmem:[%s6 + $0x8] sm:$0xff] %vm110, %v1333
    %1357 = vst.msk [vmem:[%s6 + $0x10] sm:$0xff] %vm110, %v1334
    %1358 = vst.msk [vmem:[%s6 + $0x18] sm:$0xff] %vm110, %v1335
    %1359 = vst.msk [vmem:[%s6 + $0x20] sm:$0xff] %vm110, %v1336
    %1360 = vst.msk [vmem:[%s6 + $0x28] sm:$0xff] %vm110, %v1337
    %1361 = vst.msk [vmem:[%s6 + $0x30] sm:$0xff] %vm110, %v1338
    %1362 = vst.msk [vmem:[%s6 + $0x38] sm:$0xff] %vm110, %v1339
    %1363 = vst.msk [vmem:[%s6 + $0x40] sm:$0xff] %vm110, %v1340
    %1364 = vst.msk [vmem:[%s6 + $0x48] sm:$0xff] %vm110, %v1341
    %1365 = vst.msk [vmem:[%s6 + $0x50] sm:$0xff] %vm110, %v1342
    %1366 = vst.msk [vmem:[%s6 + $0x58] sm:$0xff] %vm110, %v1343
    %1367 = vst.msk [vmem:[%s6 + $0x60] sm:$0xff] %vm110, %v1344
    %1368 = vst.msk [vmem:[%s6 + $0x68] sm:$0xff] %vm110, %v1345
    %1369 = vst.msk [vmem:[%s6 + $0x70] sm:$0xff] %vm110, %v1346
    %1370 = vst.msk [vmem:[%s6 + $0x78] sm:$0xff] %vm110, %v1347
    %1371 = vst.msk [vmem:[%s6 + $0x80] sm:$0xff] %vm110, %v1348
    %1372 = vst.msk [vmem:[%s6 + $0x88] sm:$0xff] %vm110, %v1349
    %1373 = vst.msk [vmem:[%s6 + $0x90] sm:$0xff] %vm110, %v1350
    %1374 = vst.msk [vmem:[%s6 + $0x98] sm:$0xff] %vm110, %v1351
    %1375 = vst.msk [vmem:[%s6 + $0xa0] sm:$0xff] %vm110, %v1352
    %1376 = vst.msk [vmem:[%s6 + $0xa8] sm:$0xff] %vm110, %v1353
    %1377 = vst.msk [vmem:[%s6 + $0xb0] sm:$0xff] %vm110, %v1354
    // Predicated region
    $region30: #{tpu_custom_call.1} parent=1 // pred_check
      _
    $region31: #{tpu_custom_call.1} parent=1 // pred_check_branch
      %1379 = sbr.rel (0) target = $region33
    $region32: #{tpu_custom_call.1} parent=1 // pred_region
      _
    $region33: #{tpu_custom_call.1} parent=1 // pred_fallthru
      _
    // Predicated region
    $region34: #{tpu_custom_call.1} parent=1 // pred_check
      _
    $region35: #{tpu_custom_call.1} parent=1 // pred_check_branch
      %1381 = sbr.rel (0) target = $region37
    $region36: #{tpu_custom_call.1} parent=1 // pred_region
      _
    $region37: #{tpu_custom_call.1} parent=1 // pred_fallthru
      _
    %1382 = vsyncpa [#allocation3], 1

</llo_original>
